<compile_context>
chip_gen: v7x
topology: tpu7x:2x2x1
jax: 0.10.0
libtpu: 0.0.40
codegen_flags: <defaults>
</compile_context>

<pallas_src>
import jax
import jax.numpy as jnp
from jax.experimental import pallas as pl
from jax.experimental.pallas import tpu as pltpu

TEMPERATURE = 0.2
EPSILON = 1e-5
BIN_DEVIATION = 0.2  # only used for self.limits in __init__ (not in forward)

_EXP_ARG_CLAMP = 80.0  # keep exp() finite in f32; result already saturated far below this


def _round_up(n: int, m: int) -> int:
    return ((n + m - 1) // m) * m


def and_finder_kernel(cp_ref, w_ref, x_ref, out_ref):
    # cp_ref:  [V, 2]       cut points (col 0 = lower, col 1 = upper), VMEM-resident
    # w_ref:   [V, 1]       and_weights, VMEM-resident
    # x_ref:   [V, tile_N]  batch tile, batch on the lane axis
    # out_ref: [2, tile_N]  row 0 = 1 - res, row 1 = res
    x = x_ref[...]                                   # [V, tile_N]
    cp0 = cp_ref[:, 0:1]                             # [V, 1]
    cp1 = cp_ref[:, 1:2]                             # [V, 1]
    imp = jnp.maximum(w_ref[...], 0.0)               # relu(and_weights), [V, 1]

    inv_t = 1.0 / TEMPERATURE
    # 2-exp logistic form of softmax bin 1 (clamped so exp never overflows to inf)
    a_lo = jnp.minimum((cp0 - x) * inv_t, _EXP_ARG_CLAMP)
    a_hi = jnp.minimum((x - cp1) * inv_t, _EXP_ARG_CLAMP)
    s = 1.0 + jnp.exp(a_lo) + jnp.exp(a_hi)          # = 1 / bins1, [V, tile_N]

    # (1+eps)/(bins1+eps) = (1+eps)*S / (1+eps*S); single EUP reciprocal per element
    c_mat = (1.0 + EPSILON) * s * pl.reciprocal(1.0 + EPSILON * s, approx=True)

    # reduction over the (short) sublane axis V
    c = jnp.sum(c_mat * imp, axis=0, keepdims=True)  # [1, tile_N]
    res = jnp.sum(imp) * pl.reciprocal(c, approx=True)  # [1, tile_N]

    # direct slice stores (no concatenate / relayout); lane-dense unmasked vst
    out_ref[0:1, :] = 1.0 - res
    out_ref[1:2, :] = res


def and_finder_forward_t(xT, cut_points, and_weights, *, tile_n=4096):
    """Lane-dense entry point.

    xT: [V, N] f32 (batch on lanes), cut_points: [V, 2] f32, and_weights: [V] f32
    -> [2, N] f32 (row 0 = 1-res, row 1 = res)
    """
    V, N = xT.shape
    xT = xT.astype(jnp.float32)
    cp = cut_points.astype(jnp.float32)
    w = and_weights.astype(jnp.float32).reshape(V, 1)

    # pick a lane-aligned tile and pad N up to a multiple of it
    tile_n = int(min(tile_n, _round_up(N, 128)))
    n_pad = _round_up(N, tile_n)
    if n_pad != N:
        xT = jnp.pad(xT, ((0, 0), (0, n_pad - N)))

    grid = (n_pad // tile_n,)
    outT = pl.pallas_call(
        and_finder_kernel,
        out_shape=jax.ShapeDtypeStruct((2, n_pad), jnp.float32),
        grid_spec=pltpu.PrefetchScalarGridSpec(
            num_scalar_prefetch=0,
            grid=grid,
            in_specs=[
                pl.BlockSpec((V, 2), lambda i: (0, 0)),       # cut points, resident
                pl.BlockSpec((V, 1), lambda i: (0, 0)),       # and_weights, resident
                pl.BlockSpec((V, tile_n), lambda i: (0, i)),  # x tile over batch
            ],
            out_specs=pl.BlockSpec((2, tile_n), lambda i: (0, i)),
        ),
        compiler_params=pltpu.CompilerParams(
            dimension_semantics=("parallel",),     # megacore sharding on v7x
            vmem_limit_bytes=32 * 1024 * 1024,     # tiles are tiny; safe on v5e/v6e/v7x
        ),
    )(cp, w, xT)
    return outT[:, :N]


def and_finder_forward(x, cut_points, and_weights, *, tile_n=4096):
    """Convenience wrapper matching the PyTorch layout.

    x: [N, V] f32, cut_points: [V, 2] f32, and_weights: [V] f32 -> [N, 2] f32.
    (For peak throughput, provide x already transposed and call and_finder_forward_t.)
    """
    outT = and_finder_forward_t(x.T, cut_points, and_weights, tile_n=tile_n)
    return outT.T  # [N, 2]


def and_finder_reference(x, cut_points, and_weights,
                         temperature=TEMPERATURE, epsilon=EPSILON):
    """Pure-JAX reference mirroring the PyTorch forward (float32, 3-exp softmax)."""
    N, V = x.shape
    zero = jnp.zeros((V, 1), dtype=x.dtype)
    b = jnp.cumsum(jnp.concatenate([zero, -cut_points], axis=1), axis=1)   # [V, 3]
    fixed_weights = jnp.linspace(1.0, 3.0, 3, dtype=x.dtype)               # [3]
    xr = x[:, :, None] * fixed_weights[None, None, :]                      # [N, V, 3]
    h = (xr + b[None, :, :]) / temperature
    bins = jax.nn.softmax(h, axis=2)
    importance = jax.nn.relu(and_weights)
    c = ((1.0 + epsilon) / (bins[:, :, 1] + epsilon)) @ importance         # [N]
    res = jnp.sum(importance) / c
    return jnp.stack([1.0 - res, res], axis=1)


if __name__ == "__main__":
    # NOTE: PyTorch module uses float64; TPU compute here is float32.
    key = jax.random.PRNGKey(0)
    kx, kc = jax.random.split(key)

    N, V = 8, 4  # batch, n_variables (D = 2 cut points per variable is fixed)
    x = jax.random.normal(kx, (N, V), dtype=jnp.float32)

    # deterministic cut_points: [lower, upper] per variable, lower < upper
    lo = jax.random.uniform(kc, (V, 1), dtype=jnp.float32, minval=-1.0, maxval=0.0)
    hi = lo + jax.random.uniform(jax.random.fold_in(kc, 1), (V, 1),
                                 dtype=jnp.float32, minval=0.5, maxval=1.5)
    cut_points = jnp.concatenate([lo, hi], axis=1)                          # [V, 2]

    # __init__ sets initial_weights[:] = 1
    and_weights = jnp.ones((V,), dtype=jnp.float32)

    out = and_finder_forward(x, cut_points, and_weights)
    out = jax.block_until_ready(out)

    ref = and_finder_reference(x, cut_points, and_weights)
    assert out.shape == (N, 2), out.shape
    # approx reciprocals (EUP vrcp) introduce ~1e-3-level relative deviations
    assert jnp.allclose(out, ref, atol=5e-3, rtol=5e-3), (out, ref)

    # TODO(synk): the PyTorch side-effect `self.c = torch.sum(c).item()/c.shape[0]`
    # is a host-side scalar attribute, not part of the returned tensor; omitted.
    print("KERNEL_OK")
</pallas_src>

<mosaic_0001>
module attributes {stable_mosaic.version = 11 : i64} {
  func.func @and_finder_kernel(%arg0: i32, %arg1: memref<4x2xf32, #tpu.memory_space<vmem>>, %arg2: memref<4x1xf32, #tpu.memory_space<vmem>>, %arg3: memref<4x128xf32, #tpu.memory_space<vmem>>, %arg4: memref<2x128xf32, #tpu.memory_space<vmem>>) attributes {dimension_semantics = [#tpu.dimension_semantics<parallel>], iteration_bounds = array<i64: 1>, scalar_prefetch = 0 : i64, scratch_operands = 0 : i64, tpu.core_type = #tpu.core_type<tc>, window_params = [{pipeline_mode = #tpu.pipeline_mode<synchronous>, transform_indices = @transform_0, window_bounds = array<i64: 4, 2>}, {pipeline_mode = #tpu.pipeline_mode<synchronous>, transform_indices = @transform_1, window_bounds = array<i64: 4, 1>}, {transform_indices = @transform_2, window_bounds = array<i64: 4, 128>}, {transform_indices = @transform_3, window_bounds = array<i64: 2, 128>}]} {
    %c0 = arith.constant 0 : index
    %c0_0 = arith.constant 0 : index
    %0 = vector.load %arg3[%c0, %c0_0] : memref<4x128xf32, #tpu.memory_space<vmem>>, vector<4x128xf32>
    %c0_1 = arith.constant 0 : index
    %c0_2 = arith.constant 0 : index
    %1 = vector.load %arg1[%c0_1, %c0_2] : memref<4x2xf32, #tpu.memory_space<vmem>>, vector<4x1xf32>
    %c0_3 = arith.constant 0 : index
    %c1 = arith.constant 1 : index
    %2 = vector.load %arg1[%c0_3, %c1] : memref<4x2xf32, #tpu.memory_space<vmem>>, vector<4x1xf32>
    %c0_4 = arith.constant 0 : index
    %c0_5 = arith.constant 0 : index
    %3 = vector.load %arg2[%c0_4, %c0_5] : memref<4x1xf32, #tpu.memory_space<vmem>>, vector<4x1xf32>
    %cst = arith.constant 0.000000e+00 : f32
    %4 = vector.broadcast %cst : f32 to vector<4x1xf32>
    %5 = arith.maximumf %3, %4 : vector<4x1xf32>
    %6 = vector.broadcast %1 : vector<4x1xf32> to vector<4x128xf32>
    %7 = arith.subf %6, %0 : vector<4x128xf32>
    %cst_6 = arith.constant 5.000000e+00 : f32
    %8 = vector.broadcast %cst_6 : f32 to vector<4x128xf32>
    %9 = arith.mulf %7, %8 : vector<4x128xf32>
    %cst_7 = arith.constant 8.000000e+01 : f32
    %10 = vector.broadcast %cst_7 : f32 to vector<4x128xf32>
    %11 = arith.minimumf %9, %10 : vector<4x128xf32>
    %12 = vector.broadcast %2 : vector<4x1xf32> to vector<4x128xf32>
    %13 = arith.subf %0, %12 : vector<4x128xf32>
    %cst_8 = arith.constant 5.000000e+00 : f32
    %14 = vector.broadcast %cst_8 : f32 to vector<4x128xf32>
    %15 = arith.mulf %13, %14 : vector<4x128xf32>
    %cst_9 = arith.constant 8.000000e+01 : f32
    %16 = vector.broadcast %cst_9 : f32 to vector<4x128xf32>
    %17 = arith.minimumf %15, %16 : vector<4x128xf32>
    %18 = math.exp %11 : vector<4x128xf32>
    %cst_10 = arith.constant 1.000000e+00 : f32
    %19 = vector.broadcast %cst_10 : f32 to vector<4x128xf32>
    %20 = arith.addf %19, %18 : vector<4x128xf32>
    %21 = math.exp %17 : vector<4x128xf32>
    %22 = arith.addf %20, %21 : vector<4x128xf32>
    %cst_11 = arith.constant 1.000010e+00 : f32
    %23 = vector.broadcast %cst_11 : f32 to vector<4x128xf32>
    %24 = arith.mulf %23, %22 : vector<4x128xf32>
    %cst_12 = arith.constant 9.99999974E-6 : f32
    %25 = vector.broadcast %cst_12 : f32 to vector<4x128xf32>
    %26 = arith.mulf %25, %22 : vector<4x128xf32>
    %cst_13 = arith.constant 1.000000e+00 : f32
    %27 = vector.broadcast %cst_13 : f32 to vector<4x128xf32>
    %28 = arith.addf %27, %26 : vector<4x128xf32>
    %29 = tpu.reciprocal %28 {approx = true} : vector<4x128xf32> -> vector<4x128xf32>
    %30 = arith.mulf %24, %29 : vector<4x128xf32>
    %31 = vector.broadcast %5 : vector<4x1xf32> to vector<4x128xf32>
    %32 = arith.mulf %30, %31 : vector<4x128xf32>
    %cst_14 = arith.constant dense<0.000000e+00> : vector<128xf32>
    %33 = vector.multi_reduction <add>, %32, %cst_14 [0] : vector<4x128xf32> to vector<128xf32>
    %34 = vector.shape_cast %33 : vector<128xf32> to vector<1x128xf32>
    %35 = vector.shape_cast %5 : vector<4x1xf32> to vector<1x4x1xf32>
    %cst_15 = arith.constant dense<0.000000e+00> : vector<1xf32>
    %36 = vector.multi_reduction <add>, %35, %cst_15 [1, 2] : vector<1x4x1xf32> to vector<1xf32>
    %37 = vector.shape_cast %36 : vector<1xf32> to vector<1x1x1xf32>
    %38 = vector.extract %37[0, 0, 0] : f32 from vector<1x1x1xf32>
    %39 = tpu.reciprocal %34 {approx = true} : vector<1x128xf32> -> vector<1x128xf32>
    %40 = vector.broadcast %38 : f32 to vector<1x128xf32>
    %41 = arith.mulf %40, %39 : vector<1x128xf32>
    %cst_16 = arith.constant 1.000000e+00 : f32
    %42 = vector.broadcast %cst_16 : f32 to vector<1x128xf32>
    %43 = arith.subf %42, %41 : vector<1x128xf32>
    %c0_17 = arith.constant 0 : index
    %c0_18 = arith.constant 0 : index
    %44 = vector.load %arg4[%c0_17, %c0_18] : memref<2x128xf32, #tpu.memory_space<vmem>>, vector<1x128xf32>
    tpu.vector_store %arg4[%c0_17, %c0_18], %43 {strides = array<i32>} : memref<2x128xf32, #tpu.memory_space<vmem>>, vector<1x128xf32>,
    %c1_19 = arith.constant 1 : index
    %c0_20 = arith.constant 0 : index
    %45 = vector.load %arg4[%c1_19, %c0_20] : memref<2x128xf32, #tpu.memory_space<vmem>>, vector<1x128xf32>
    tpu.vector_store %arg4[%c1_19, %c0_20], %41 {strides = array<i32>} : memref<2x128xf32, #tpu.memory_space<vmem>>, vector<1x128xf32>,
    return
  }
  func.func @transform_0(%arg0: i32) -> (i32, i32) {
    %c0_i32 = arith.constant 0 : i32
    %c0_i32_0 = arith.constant 0 : i32
    %c0_i32_1 = arith.constant 0 : i32
    return %c0_i32, %c0_i32_0 : i32, i32
  }
  func.func @transform_1(%arg0: i32) -> (i32, i32) {
    %c0_i32 = arith.constant 0 : i32
    %c0_i32_0 = arith.constant 0 : i32
    %c0_i32_1 = arith.constant 0 : i32
    return %c0_i32, %c0_i32_0 : i32, i32
  }
  func.func @transform_2(%arg0: i32) -> (i32, i32) {
    %c0_i32 = arith.constant 0 : i32
    %c0_i32_0 = arith.constant 0 : i32
    return %c0_i32, %arg0 : i32, i32
  }
  func.func @transform_3(%arg0: i32) -> (i32, i32) {
    %c0_i32 = arith.constant 0 : i32
    %c0_i32_0 = arith.constant 0 : i32
    return %c0_i32, %arg0 : i32, i32
  }
}

</mosaic_0001>

<llo_original>
// kernel: tpu_custom_call.1
$region0: #{tpu_custom_call.1}
  #allocation0 [shape = 'u32[]', space=smem, size = 0x4, offset = 0x4, fixed_abs, tag = 'smem constant byte address 0x4 - core index']
  #allocation1 [shape = 'u32[144,128]{1,0:T(1,128)}', space=vmem, size = 0x12000, scoped, tag = 'internal scratch']
  %s0 = inlined_call_operand.vmem [shape: f32[4,2], index: 0, kind: input, shape index: {}]
  %s1 = inlined_call_operand.vmem [shape: f32[4,1], index: 1, kind: input, shape index: {}]
  %s2 = inlined_call_operand.vmem [shape: f32[4,128], index: 2, kind: input, shape index: {}]
  %s3 = inlined_call_operand.hbm [shape: f32[2,128], index: 3, kind: output, shape index: {}]
  %s4 = sld [smem:[#allocation0]]
  $region22: #{tpu_custom_call.1} parent=0
    _
  %s6 = ssub.s32 1, %s4
  %s7 = scalar_select 0, %s6, %s4
  $region1: #{tpu_custom_call.1} parent=0
    #allocation2 [shape = 'u8[1024]{0}', space=vmem, size = 0x400, scoped, tag = 'output window, operand 0, single buffered']
    #allocation3 [shape = 's32[1]{0}', space=sflag, size = 0x4, scoped, tag = 'scoped memory for tpu_custom_call.1']
    %8 = vsyncpa [#allocation3], 0
    // Predicated region
    $region2: #{tpu_custom_call.1} parent=1 // pred_check
      _
    $region3: #{tpu_custom_call.1} parent=1 // pred_check_branch
      %10 = sbr.rel (0) target = $region5
    $region4: #{tpu_custom_call.1} parent=1 // pred_region
      _
    $region5: #{tpu_custom_call.1} parent=1 // pred_fallthru
      _
    // Predicated region
    $region6: #{tpu_custom_call.1} parent=1 // pred_check
      _
    $region7: #{tpu_custom_call.1} parent=1 // pred_check_branch
      %12 = sbr.rel (0) target = $region9
    $region8: #{tpu_custom_call.1} parent=1 // pred_region
      _
    $region9: #{tpu_custom_call.1} parent=1 // pred_fallthru
      _
    // Predicated region
    $region10: #{tpu_custom_call.1} parent=1 // pred_check
      _
    $region11: #{tpu_custom_call.1} parent=1 // pred_check_branch
      %14 = sbr.rel (0) target = $region13
    $region12: #{tpu_custom_call.1} parent=1 // pred_region
      _
    $region13: #{tpu_custom_call.1} parent=1 // pred_fallthru
      _
    %v15 = vld [vmem:[%s2] sm:$0xf]
    %v16 = vld [vmem:[%s0] sm:$0xf]
    %v17 = vld [vmem:[%s1] sm:$0xf]
    %v18 = vmax.f32 %v17, 0.0
    %20 = vset.pattern.permute.xlu0 0
    %21 = vperm.xlu0 %20, %v16
    %v22 = vpop.permute.xlu0 %21
    %v24 = vsub.f32 %v22, %v15
    %v25 = vmul.f32 %v24, 5.0
    %v26 = vmin.f32 %v25, 80.0
    %27 = vset.pattern.permute.xlu0 1
    %28 = vperm.xlu0 %27, %v16
    %v29 = vpop.permute.xlu0 %28
    %v31 = vsub.f32 %v15, %v29
    %v32 = vmul.f32 %v31, 5.0
    %v33 = vmin.f32 %v32, 80.0
    %v34 = vmul.f32 %v26, 1.442695
    %v35 = vpow.pop %v34
    %v36 = vadd.f32 %v35, 1.0
    %v37 = vmul.f32 %v33, 1.442695
    %v38 = vpow.pop %v37
    %v39 = vadd.f32 %v36, %v38
    %v40 = vmul.f32 %v39, 1.00001
    %v41 = vmul.f32 %v39, 1e-05
    %v42 = vadd.f32 %v41, 1.0
    %v43 = vrcp.pop %v42
    %v44 = vmul.f32 %v40, %v43
    %46 = vset.pattern.permute.xlu0 0
    %47 = vperm.xlu0 %46, %v18
    %v48 = vpop.permute.xlu0 %47
    %v50 = vmul.f32 %v44, %v48
    %vm51 = vcmask 1043456
    %v52 = vsel %vm51, %v50, 0.0
    %v53 = vrot.slane %v52, 4
    %v54 = vadd.f32 %v52, %v53
    %v55 = vrot.slane %v54, 2
    %v56 = vadd.f32 %v54, %v55
    %v57 = vrot.slane %v56, 1
    %v58 = vadd.f32 %v56, %v57
    %vm59 = vcmask 3072
    %v60 = vsel %vm59, %v18, 0.0
    %61 = vadd.xlane.f32.xlu0 %v60
    %v62 = vpop.xlane.xlu0 %61
    %v63 = vrot.slane %v62, 4
    %v64 = vadd.f32 %v62, %v63
    %v65 = vrot.slane %v64, 2
    %v66 = vadd.f32 %v64, %v65
    %v67 = vrot.slane %v66, 1
    %v68 = vadd.f32 %v66, %v67
    %s69 = vtos %v68
    %v70 = vrcp.pop %v58
    %v71 = vstv %s69
    %v72 = vmul.f32 %v71, %v70
    %v73 = vsub.f32 1.0, %v72
    %74 = vst [vmem:[#allocation2] sm:$0x1] %v73
    %75 = vst [vmem:[#allocation2 + $0x1] sm:$0x1] %v72
    // Predicated region
    $region14: #{tpu_custom_call.1} parent=1 // pred_check
      _
    $region15: #{tpu_custom_call.1} parent=1 // pred_check_branch
      %77 = sbr.rel (0) target = $region17
    $region16: #{tpu_custom_call.1} parent=1 // pred_region
      %s79 = ssub.s32 32, 32
      %80 = vsyncadd [#allocation3], %s79
      %s82 = sshll.u32 [#allocation2], 4
      %s83 = int_to_ptr.vmem [resolvable:$true] %s82
      %85 = dma.vmem_to_hbm [thread:$0]  %s83, 32, %s3, [#allocation3]
    $region17: #{tpu_custom_call.1} parent=1 // pred_fallthru
      _
    // Predicated region
    $region18: #{tpu_custom_call.1} parent=1 // pred_check
      _
    $region19: #{tpu_custom_call.1} parent=1 // pred_check_branch
      %87 = sbr.rel (0) target = $region21
    $region20: #{tpu_custom_call.1} parent=1 // pred_region
      %88 = dma.done [#allocation3], 32
    $region21: #{tpu_custom_call.1} parent=1 // pred_fallthru
      _
    %89 = vsyncpa [#allocation3], 1

</llo_original>
